<compile_context>
chip_gen: v7x
topology: tpu7x:2x2x1
jax: 0.10.0
libtpu: 0.0.40
codegen_flags: <defaults>
</compile_context>

<pallas_src>
import jax
import jax.numpy as jnp
from jax import lax
from jax.experimental import pallas as pl
from jax.experimental.pallas import tpu as pltpu
import numpy as np


def _elu(z):
    return jnp.where(z > 0, z, jnp.exp(jnp.minimum(z, 0.0)) - 1.0)


def encoder_block_kernel(ea_ref, eb_ref, rc_ref, mask_ref, wa_ref, wb_ref, w2_ref,
                         t1_ref, t2_ref, out_ref, pad_scr):
    N, Co2 = out_ref.shape              # N = B * (Fo + 2) rows (common per-batch stride)
    Co = Co2 // 2
    Co3, Co4 = 3 * Co, 4 * Co
    M = N - 2                           # rows carrying valid residual-conv results
    f32 = jnp.float32

    # ---- encoder StreamConv2d (k=(4,3), freq stride 2, pad 1) + folded bias/BN + ELU ----
    # Row j = b*S + fo holds the pair-of-freqs slab for output freq fo of batch item b:
    #   taps kf=0,1 (all 4 time taps) -> ea_ref (8*Ci lanes); tap kf=2 -> eb_ref (4*Ci lanes).
    z1 = (jnp.dot(ea_ref[...], wa_ref[...], preferred_element_type=f32)
          + jnp.dot(eb_ref[...], wb_ref[...], preferred_element_type=f32)
          + t1_ref[...])                # conv bias + eval-BatchNorm folded into wa/wb/t1
    y = _elu(z1)
    y_m = y * mask_ref[...]             # zero the 2 per-batch-item padding rows

    # ---- residual StreamConv2d (k=(4,3), stride 1, freq pad 1) ----
    # bf16 scratch: rows = padded freq for all batch items, lanes = [3 cached frames | y].
    pad_scr[0:N, 0:Co3] = rc_ref[...]                     # cached frames (freq-padded slab)
    pad_scr[0:1, Co3:Co4] = jnp.zeros((1, Co), pad_scr.dtype)   # top border of the y band
    pad_scr[1:N, Co3:Co4] = y_m[0:N - 1, :].astype(pad_scr.dtype)  # y shifted by +1 row;
    # masked rows guarantee the per-batch-item border rows of the y band stay zero.

    acc2 = jnp.zeros((M, Co), f32)
    for k in range(3):                  # 3 tap-stacked matmuls, K = 4*Co, M = B*(Fo+2)-2
        acc2 = acc2 + jnp.dot(pad_scr[k:k + M, :],
                              w2_ref[k * Co4:(k + 1) * Co4, :],
                              preferred_element_type=f32)
    y2 = _elu(acc2 + t2_ref[...])

    # fused lane-dense output slab: [:, :Co] = block output (y2 + skip), [:, Co:] = y.
    out_ref[0:M, :] = jnp.concatenate([y2 + y[0:M, :], y_m[0:M, :]], axis=-1)
    out_ref[M:N, :] = jnp.zeros((2, Co2), out_ref.dtype)


def encoder_block_pallas(x, conv_cache, res_cache, p):
    """x: (B,Ci,1,Fi)  conv_cache: (B,Ci,3,Fi)  res_cache: (B,Co,3,Fo)  (PyTorch NCHW)."""
    B, Ci, _, Fi = x.shape
    Co = p["w1"].shape[0]
    Fo = (Fi - 1) // 2 + 1              # conv k=3, stride 2, pad 1
    S = Fo + 2                          # common per-batch-item row stride
    N = B * S
    R = ((N + 7) // 8) * 8              # scratch rows rounded to a sublane multiple
    eps = 1e-5
    f32, bf16 = jnp.float32, jnp.bfloat16

    # ---------------- glue: streaming cache handling + layout plumbing (bf16 precast) ----
    xin = jnp.concatenate([conv_cache, x], axis=2)                    # (B,Ci,4,Fi)
    new_conv_cache = xin[:, :, 1:, :]

    # Encoder-conv slabs: channel-last, 4 time taps folded into lanes, the stride-2 freq
    # conv expressed by a metadata-only pair-of-freqs reshape; 2 pad rows per batch item
    # give every array the same row stride S so the batch folds into the matmul M dim.
    encc = jnp.transpose(xin, (0, 3, 2, 1)).reshape(B, Fi, 4 * Ci).astype(bf16)
    Fpe = Fi + 2 + ((Fi + 2) % 2)                                     # even padded freq len
    encp = jnp.pad(encc, ((0, 0), (1, Fpe - Fi - 1), (0, 0))).reshape(B, Fpe // 2, 8 * Ci)
    enc_a = jnp.pad(encp[:, 0:Fo, :], ((0, 0), (0, 2), (0, 0))).reshape(N, 8 * Ci)
    enc_b = jnp.pad(encp[:, 1:Fo + 1, 0:4 * Ci], ((0, 0), (0, 2), (0, 0))).reshape(N, 4 * Ci)

    # Residual-conv cached frames: channel-last, 3 time taps folded into lanes, freq pad 1.
    rc = jnp.transpose(res_cache, (0, 3, 2, 1)).reshape(B, Fo, 3 * Co).astype(bf16)
    rc = jnp.pad(rc, ((0, 0), (1, 1), (0, 0))).reshape(N, 3 * Co)

    # Row-validity mask (1 on the Fo real rows, 0 on the 2 pad rows of each batch item).
    vmask = jnp.pad(jnp.ones((B, Fo, 1), f32), ((0, 0), (0, 2), (0, 0))).reshape(N, 1)

    # Weights: tap-stacked 2-D bf16 slabs; conv bias + eval-BN folded into weights / shifts.
    s1 = p["gamma1"] / jnp.sqrt(p["var1"] + eps)
    t1 = ((p["b1"] - p["mean1"]) * s1 + p["beta1"]).reshape(1, Co).astype(f32)
    s2 = p["gamma2"] / jnp.sqrt(p["var2"] + eps)
    t2 = ((p["b2"] - p["mean2"]) * s2 + p["beta2"]).reshape(1, Co).astype(f32)
    wa = (jnp.transpose(p["w1"][:, :, :, 0:2], (3, 2, 1, 0)).reshape(8 * Ci, Co) * s1).astype(bf16)
    wb = (jnp.transpose(p["w1"][:, :, :, 2], (2, 1, 0)).reshape(4 * Ci, Co) * s1).astype(bf16)
    w2 = (jnp.transpose(p["w2"], (3, 2, 1, 0)).reshape(12 * Co, Co) * s2).astype(bf16)

    flops = 2 * N * Co * 12 * Ci + 2 * (N - 2) * Co * 12 * Co
    bytes_accessed = (2 * (enc_a.size + enc_b.size + rc.size + wa.size + wb.size + w2.size)
                      + 4 * (vmask.size + t1.size + t2.size + N * 2 * Co))

    out = pl.pallas_call(
        encoder_block_kernel,
        out_shape=jax.ShapeDtypeStruct((N, 2 * Co), f32),
        grid=(1,),                                        # whole batch in one grid step
        in_specs=[
            pl.BlockSpec((N, 8 * Ci), lambda i: (0, 0)),      # encoder slab, taps kf=0,1
            pl.BlockSpec((N, 4 * Ci), lambda i: (0, 0)),      # encoder slab, tap  kf=2
            pl.BlockSpec((N, 3 * Co), lambda i: (0, 0)),      # residual cached-frames slab
            pl.BlockSpec((N, 1), lambda i: (0, 0)),           # row-validity mask
            pl.BlockSpec((8 * Ci, Co), lambda i: (0, 0)),     # W_a
            pl.BlockSpec((4 * Ci, Co), lambda i: (0, 0)),     # W_b
            pl.BlockSpec((12 * Co, Co), lambda i: (0, 0)),    # W2 (3 slabs of 4*Co)
            pl.BlockSpec((1, Co), lambda i: (0, 0)),          # fused shift 1
            pl.BlockSpec((1, Co), lambda i: (0, 0)),          # fused shift 2
        ],
        out_specs=pl.BlockSpec((N, 2 * Co), lambda i: (0, 0)),   # fused [out | y] slab
        scratch_shapes=[pltpu.VMEM((R, 4 * Co), bf16)],
        compiler_params=pltpu.CompilerParams(dimension_semantics=("arbitrary",)),
        cost_estimate=pl.CostEstimate(flops=int(flops),
                                      transcendentals=int(2 * N * Co),
                                      bytes_accessed=int(bytes_accessed)),
    )(enc_a, enc_b, rc, vmask, wa, wb, w2, t1, t2)

    # ---------------- glue: back to PyTorch NCHW + new caches ----------------
    slab = out.reshape(B, S, 2 * Co)
    out_nchw = jnp.transpose(slab[:, 0:Fo, 0:Co], (0, 2, 1))[:, :, None, :]      # (B,Co,1,Fo)
    y_frame = jnp.transpose(slab[:, 0:Fo, Co:2 * Co], (0, 2, 1))[:, :, None, :]  # (B,Co,1,Fo)
    new_res_cache = jnp.concatenate([res_cache[:, :, 1:, :], y_frame], axis=2)
    return out_nchw, new_conv_cache, new_res_cache


# -------------------- pure-JAX reference (sanity check only) --------------------
def _bn_eval(v, gamma, beta, mean, var, eps=1e-5):
    sh = (1, -1, 1, 1)
    return (v - mean.reshape(sh)) / jnp.sqrt(var + eps).reshape(sh) * gamma.reshape(sh) + beta.reshape(sh)


def ref_forward(x, conv_cache, res_cache, p):
    dn = ("NCHW", "OIHW", "NCHW")
    xin = jnp.concatenate([conv_cache, x], axis=2)
    new_cc = xin[:, :, 1:, :]
    y = lax.conv_general_dilated(xin, p["w1"], (1, 2), ((0, 0), (1, 1)),
                                 dimension_numbers=dn, precision=lax.Precision.HIGHEST)
    y = y + p["b1"].reshape(1, -1, 1, 1)
    y = jax.nn.elu(_bn_eval(y, p["gamma1"], p["beta1"], p["mean1"], p["var1"]))
    zin = jnp.concatenate([res_cache, y], axis=2)
    new_rc = zin[:, :, 1:, :]
    z = lax.conv_general_dilated(zin, p["w2"], (1, 1), ((0, 0), (1, 1)),
                                 dimension_numbers=dn, precision=lax.Precision.HIGHEST)
    z = z + p["b2"].reshape(1, -1, 1, 1)
    z = jax.nn.elu(_bn_eval(z, p["gamma2"], p["beta2"], p["mean2"], p["var2"])) + y
    return z, new_cc, new_rc


def _make_params(key, Ci, Co):
    ks = jax.random.split(key, 12)
    f32 = jnp.float32
    return {
        "w1": 0.1 * jax.random.normal(ks[0], (Co, Ci, 4, 3), f32),
        "b1": 0.1 * jax.random.normal(ks[1], (Co,), f32),
        "gamma1": 1.0 + 0.1 * jax.random.normal(ks[2], (Co,), f32),
        "beta1": 0.1 * jax.random.normal(ks[3], (Co,), f32),
        "mean1": 0.1 * jax.random.normal(ks[4], (Co,), f32),
        "var1": 0.5 + jax.random.uniform(ks[5], (Co,), f32),
        "w2": 0.1 * jax.random.normal(ks[6], (Co, Co, 4, 3), f32),
        "b2": 0.1 * jax.random.normal(ks[7], (Co,), f32),
        "gamma2": 1.0 + 0.1 * jax.random.normal(ks[8], (Co,), f32),
        "beta2": 0.1 * jax.random.normal(ks[9], (Co,), f32),
        "mean2": 0.1 * jax.random.normal(ks[10], (Co,), f32),
        "var2": 0.5 + jax.random.uniform(ks[11], (Co,), f32),
    }


def _check(key, B, Ci, Co, Fi):
    f32 = jnp.float32
    Fo = (Fi - 1) // 2 + 1
    kp, kx, kc, kr = jax.random.split(key, 4)
    params = _make_params(kp, Ci, Co)
    x = jax.random.normal(kx, (B, Ci, 1, Fi), f32)
    conv_cache = jax.random.normal(kc, (B, Ci, 3, Fi), f32)
    res_cache = jax.random.normal(kr, (B, Co, 3, Fo), f32)

    run = jax.jit(lambda a, b, c: encoder_block_pallas(a, b, c, params))
    out, new_cc, new_rc = run(x, conv_cache, res_cache)
    jax.block_until_ready((out, new_cc, new_rc))

    ref_out, ref_cc, ref_rc = ref_forward(x, conv_cache, res_cache, params)
    np.testing.assert_allclose(np.asarray(out), np.asarray(ref_out), rtol=5e-2, atol=5e-2)
    np.testing.assert_allclose(np.asarray(new_cc), np.asarray(ref_cc), rtol=1e-6, atol=1e-6)
    np.testing.assert_allclose(np.asarray(new_rc), np.asarray(ref_rc), rtol=5e-2, atol=5e-2)


if __name__ == "__main__":
    # NOTE: nn.BatchNorm2d is applied in eval mode (running statistics), the natural
    # setting for a streaming/inference module.
    key = jax.random.PRNGKey(0)
    k1, k2 = jax.random.split(key)
    _check(k1, B=2, Ci=4, Co=8, Fi=16)    # even Fi
    _check(k2, B=3, Ci=5, Co=8, Fi=15)    # odd Fi, B > 2 (locks the tap/offset algebra)
    print("KERNEL_OK")
</pallas_src>

<mosaic_0001>
module attributes {stable_mosaic.version = 11 : i64} {
  func.func @encoder_block_kernel(%arg0: i32, %arg1: memref<20x32xbf16, #tpu.memory_space<vmem>>, %arg2: memref<20x16xbf16, #tpu.memory_space<vmem>>, %arg3: memref<20x24xbf16, #tpu.memory_space<vmem>>, %arg4: memref<20x1xf32, #tpu.memory_space<vmem>>, %arg5: memref<32x8xbf16, #tpu.memory_space<vmem>>, %arg6: memref<16x8xbf16, #tpu.memory_space<vmem>>, %arg7: memref<96x8xbf16, #tpu.memory_space<vmem>>, %arg8: memref<1x8xf32, #tpu.memory_space<vmem>>, %arg9: memref<1x8xf32, #tpu.memory_space<vmem>>, %arg10: memref<20x16xf32, #tpu.memory_space<vmem>>, %arg11: memref<24x32xbf16, #tpu.memory_space<vmem>>) attributes {dimension_semantics = [#tpu.dimension_semantics<arbitrary>], iteration_bounds = array<i64: 1>, scalar_prefetch = 0 : i64, scratch_operands = 1 : i64, tpu.core_type = #tpu.core_type<tc>, window_params = [{pipeline_mode = #tpu.pipeline_mode<synchronous>, transform_indices = @transform_0, window_bounds = array<i64: 20, 32>}, {pipeline_mode = #tpu.pipeline_mode<synchronous>, transform_indices = @transform_1, window_bounds = array<i64: 20, 16>}, {pipeline_mode = #tpu.pipeline_mode<synchronous>, transform_indices = @transform_2, window_bounds = array<i64: 20, 24>}, {pipeline_mode = #tpu.pipeline_mode<synchronous>, transform_indices = @transform_3, window_bounds = array<i64: 20, 1>}, {pipeline_mode = #tpu.pipeline_mode<synchronous>, transform_indices = @transform_4, window_bounds = array<i64: 32, 8>}, {pipeline_mode = #tpu.pipeline_mode<synchronous>, transform_indices = @transform_5, window_bounds = array<i64: 16, 8>}, {pipeline_mode = #tpu.pipeline_mode<synchronous>, transform_indices = @transform_6, window_bounds = array<i64: 96, 8>}, {pipeline_mode = #tpu.pipeline_mode<synchronous>, transform_indices = @transform_7, window_bounds = array<i64: 1, 8>}, {pipeline_mode = #tpu.pipeline_mode<synchronous>, transform_indices = @transform_8, window_bounds = array<i64: 1, 8>}, {pipeline_mode = #tpu.pipeline_mode<synchronous>, transform_indices = @transform_9, window_bounds = array<i64: 20, 16>}]} {
    %c0 = arith.constant 0 : index
    %c0_0 = arith.constant 0 : index
    %0 = vector.load %arg1[%c0, %c0_0] : memref<20x32xbf16, #tpu.memory_space<vmem>>, vector<20x32xbf16>
    %c0_1 = arith.constant 0 : index
    %c0_2 = arith.constant 0 : index
    %1 = vector.load %arg5[%c0_1, %c0_2] : memref<32x8xbf16, #tpu.memory_space<vmem>>, vector<32x8xbf16>
    %cst = arith.constant dense<0.000000e+00> : vector<20x8xf32>
    %2 = tpu.matmul %0, %1, %cst {dimension_numbers = #tpu.dot_dimension_numbers<[1], [0], [0], [1], [0, 0, 1, 1], [], []>} : vector<20x32xbf16>, vector<32x8xbf16>, vector<20x8xf32> -> vector<20x8xf32>
    %c0_3 = arith.constant 0 : index
    %c0_4 = arith.constant 0 : index
    %3 = vector.load %arg2[%c0_3, %c0_4] : memref<20x16xbf16, #tpu.memory_space<vmem>>, vector<20x16xbf16>
    %c0_5 = arith.constant 0 : index
    %c0_6 = arith.constant 0 : index
    %4 = vector.load %arg6[%c0_5, %c0_6] : memref<16x8xbf16, #tpu.memory_space<vmem>>, vector<16x8xbf16>
    %cst_7 = arith.constant dense<0.000000e+00> : vector<20x8xf32>
    %5 = tpu.matmul %3, %4, %cst_7 {dimension_numbers = #tpu.dot_dimension_numbers<[1], [0], [0], [1], [0, 0, 1, 1], [], []>} : vector<20x16xbf16>, vector<16x8xbf16>, vector<20x8xf32> -> vector<20x8xf32>
    %6 = arith.addf %2, %5 : vector<20x8xf32>
    %c0_8 = arith.constant 0 : index
    %c0_9 = arith.constant 0 : index
    %7 = vector.load %arg8[%c0_8, %c0_9] : memref<1x8xf32, #tpu.memory_space<vmem>>, vector<1x8xf32>
    %8 = vector.broadcast %7 : vector<1x8xf32> to vector<20x8xf32>
    %9 = arith.addf %6, %8 : vector<20x8xf32>
    %cst_10 = arith.constant 0.000000e+00 : f32
    %10 = vector.broadcast %cst_10 : f32 to vector<20x8xf32>
    %11 = arith.cmpf ogt, %9, %10 : vector<20x8xf32>
    %cst_11 = arith.constant 0.000000e+00 : f32
    %12 = vector.broadcast %cst_11 : f32 to vector<20x8xf32>
    %13 = arith.minimumf %9, %12 : vector<20x8xf32>
    %14 = math.exp %13 : vector<20x8xf32>
    %cst_12 = arith.constant 1.000000e+00 : f32
    %15 = vector.broadcast %cst_12 : f32 to vector<20x8xf32>
    %16 = arith.subf %14, %15 : vector<20x8xf32>
    %17 = arith.select %11, %9, %16 : vector<20x8xi1>, vector<20x8xf32>
    %c0_13 = arith.constant 0 : index
    %c0_14 = arith.constant 0 : index
    %18 = vector.load %arg4[%c0_13, %c0_14] : memref<20x1xf32, #tpu.memory_space<vmem>>, vector<20x1xf32>
    %19 = vector.broadcast %18 : vector<20x1xf32> to vector<20x8xf32>
    %20 = arith.mulf %17, %19 : vector<20x8xf32>
    %c0_15 = arith.constant 0 : index
    %c0_16 = arith.constant 0 : index
    %21 = vector.load %arg3[%c0_15, %c0_16] : memref<20x24xbf16, #tpu.memory_space<vmem>>, vector<20x24xbf16>
    %c0_17 = arith.constant 0 : index
    %c0_18 = arith.constant 0 : index
    %22 = vector.load %arg11[%c0_17, %c0_18] : memref<24x32xbf16, #tpu.memory_space<vmem>>, vector<20x24xbf16>
    tpu.vector_store %arg11[%c0_17, %c0_18], %21 {strides = array<i32>} : memref<24x32xbf16, #tpu.memory_space<vmem>>, vector<20x24xbf16>,
    %cst_19 = arith.constant 0.000000e+00 : bf16
    %23 = vector.broadcast %cst_19 : bf16 to vector<1x8xbf16>
    %c0_20 = arith.constant 0 : index
    %c24 = arith.constant 24 : index
    %24 = vector.load %arg11[%c0_20, %c24] : memref<24x32xbf16, #tpu.memory_space<vmem>>, vector<1x8xbf16>
    tpu.vector_store %arg11[%c0_20, %c24], %23 {strides = array<i32>} : memref<24x32xbf16, #tpu.memory_space<vmem>>, vector<1x8xbf16>,
    %25 = vector.extract_strided_slice %20 {offsets = [0, 0], sizes = [19, 8], strides = [1, 1]} : vector<20x8xf32> to vector<19x8xf32>
    %26 = arith.truncf %25 : vector<19x8xf32> to vector<19x8xbf16>
    %c1 = arith.constant 1 : index
    %c24_21 = arith.constant 24 : index
    %27 = vector.load %arg11[%c1, %c24_21] : memref<24x32xbf16, #tpu.memory_space<vmem>>, vector<19x8xbf16>
    tpu.vector_store %arg11[%c1, %c24_21], %26 {strides = array<i32>} : memref<24x32xbf16, #tpu.memory_space<vmem>>, vector<19x8xbf16>,
    %cst_22 = arith.constant 0.000000e+00 : f32
    %28 = vector.broadcast %cst_22 : f32 to vector<18x8xf32>
    %c0_23 = arith.constant 0 : index
    %c0_24 = arith.constant 0 : index
    %29 = vector.load %arg11[%c0_23, %c0_24] : memref<24x32xbf16, #tpu.memory_space<vmem>>, vector<18x32xbf16>
    %c0_25 = arith.constant 0 : index
    %c0_26 = arith.constant 0 : index
    %30 = vector.load %arg7[%c0_25, %c0_26] : memref<96x8xbf16, #tpu.memory_space<vmem>>, vector<32x8xbf16>
    %cst_27 = arith.constant dense<0.000000e+00> : vector<18x8xf32>
    %31 = tpu.matmul %29, %30, %cst_27 {dimension_numbers = #tpu.dot_dimension_numbers<[1], [0], [0], [1], [0, 0, 1, 1], [], []>} : vector<18x32xbf16>, vector<32x8xbf16>, vector<18x8xf32> -> vector<18x8xf32>
    %32 = arith.addf %28, %31 : vector<18x8xf32>
    %c1_28 = arith.constant 1 : index
    %c0_29 = arith.constant 0 : index
    %33 = vector.load %arg11[%c1_28, %c0_29] : memref<24x32xbf16, #tpu.memory_space<vmem>>, vector<18x32xbf16>
    %c32 = arith.constant 32 : index
    %c0_30 = arith.constant 0 : index
    %34 = vector.load %arg7[%c32, %c0_30] : memref<96x8xbf16, #tpu.memory_space<vmem>>, vector<32x8xbf16>
    %cst_31 = arith.constant dense<0.000000e+00> : vector<18x8xf32>
    %35 = tpu.matmul %33, %34, %cst_31 {dimension_numbers = #tpu.dot_dimension_numbers<[1], [0], [0], [1], [0, 0, 1, 1], [], []>} : vector<18x32xbf16>, vector<32x8xbf16>, vector<18x8xf32> -> vector<18x8xf32>
    %36 = arith.addf %32, %35 : vector<18x8xf32>
    %c2 = arith.constant 2 : index
    %c0_32 = arith.constant 0 : index
    %37 = vector.load %arg11[%c2, %c0_32] : memref<24x32xbf16, #tpu.memory_space<vmem>>, vector<18x32xbf16>
    %c64 = arith.constant 64 : index
    %c0_33 = arith.constant 0 : index
    %38 = vector.load %arg7[%c64, %c0_33] : memref<96x8xbf16, #tpu.memory_space<vmem>>, vector<32x8xbf16>
    %cst_34 = arith.constant dense<0.000000e+00> : vector<18x8xf32>
    %39 = tpu.matmul %37, %38, %cst_34 {dimension_numbers = #tpu.dot_dimension_numbers<[1], [0], [0], [1], [0, 0, 1, 1], [], []>} : vector<18x32xbf16>, vector<32x8xbf16>, vector<18x8xf32> -> vector<18x8xf32>
    %40 = arith.addf %36, %39 : vector<18x8xf32>
    %c0_35 = arith.constant 0 : index
    %c0_36 = arith.constant 0 : index
    %41 = vector.load %arg9[%c0_35, %c0_36] : memref<1x8xf32, #tpu.memory_space<vmem>>, vector<1x8xf32>
    %42 = vector.broadcast %41 : vector<1x8xf32> to vector<18x8xf32>
    %43 = arith.addf %40, %42 : vector<18x8xf32>
    %cst_37 = arith.constant 0.000000e+00 : f32
    %44 = vector.broadcast %cst_37 : f32 to vector<18x8xf32>
    %45 = arith.cmpf ogt, %43, %44 : vector<18x8xf32>
    %cst_38 = arith.constant 0.000000e+00 : f32
    %46 = vector.broadcast %cst_38 : f32 to vector<18x8xf32>
    %47 = arith.minimumf %43, %46 : vector<18x8xf32>
    %48 = math.exp %47 : vector<18x8xf32>
    %cst_39 = arith.constant 1.000000e+00 : f32
    %49 = vector.broadcast %cst_39 : f32 to vector<18x8xf32>
    %50 = arith.subf %48, %49 : vector<18x8xf32>
    %51 = arith.select %45, %43, %50 : vector<18x8xi1>, vector<18x8xf32>
    %52 = vector.extract_strided_slice %17 {offsets = [0, 0], sizes = [18, 8], strides = [1, 1]} : vector<20x8xf32> to vector<18x8xf32>
    %53 = arith.addf %51, %52 : vector<18x8xf32>
    %54 = vector.extract_strided_slice %20 {offsets = [0, 0], sizes = [18, 8], strides = [1, 1]} : vector<20x8xf32> to vector<18x8xf32>
    %55 = tpu.concatenate %53, %54 in 1 : vector<18x8xf32>, vector<18x8xf32> -> vector<18x16xf32>
    %c0_40 = arith.constant 0 : index
    %c0_41 = arith.constant 0 : index
    %56 = vector.load %arg10[%c0_40, %c0_41] : memref<20x16xf32, #tpu.memory_space<vmem>>, vector<18x16xf32>
    tpu.vector_store %arg10[%c0_40, %c0_41], %55 {strides = array<i32>} : memref<20x16xf32, #tpu.memory_space<vmem>>, vector<18x16xf32>,
    %cst_42 = arith.constant 0.000000e+00 : f32
    %57 = vector.broadcast %cst_42 : f32 to vector<2x16xf32>
    %c18 = arith.constant 18 : index
    %c0_43 = arith.constant 0 : index
    %58 = vector.load %arg10[%c18, %c0_43] : memref<20x16xf32, #tpu.memory_space<vmem>>, vector<2x16xf32>
    tpu.vector_store %arg10[%c18, %c0_43], %57 {strides = array<i32>} : memref<20x16xf32, #tpu.memory_space<vmem>>, vector<2x16xf32>,
    return
  }
  func.func @transform_0(%arg0: i32) -> (i32, i32) {
    %c0_i32 = arith.constant 0 : i32
    %c0_i32_0 = arith.constant 0 : i32
    %c0_i32_1 = arith.constant 0 : i32
    return %c0_i32, %c0_i32_0 : i32, i32
  }
  func.func @transform_1(%arg0: i32) -> (i32, i32) {
    %c0_i32 = arith.constant 0 : i32
    %c0_i32_0 = arith.constant 0 : i32
    %c0_i32_1 = arith.constant 0 : i32
    return %c0_i32, %c0_i32_0 : i32, i32
  }
  func.func @transform_2(%arg0: i32) -> (i32, i32) {
    %c0_i32 = arith.constant 0 : i32
    %c0_i32_0 = arith.constant 0 : i32
    %c0_i32_1 = arith.constant 0 : i32
    return %c0_i32, %c0_i32_0 : i32, i32
  }
  func.func @transform_3(%arg0: i32) -> (i32, i32) {
    %c0_i32 = arith.constant 0 : i32
    %c0_i32_0 = arith.constant 0 : i32
    %c0_i32_1 = arith.constant 0 : i32
    return %c0_i32, %c0_i32_0 : i32, i32
  }
  func.func @transform_4(%arg0: i32) -> (i32, i32) {
    %c0_i32 = arith.constant 0 : i32
    %c0_i32_0 = arith.constant 0 : i32
    %c0_i32_1 = arith.constant 0 : i32
    return %c0_i32, %c0_i32_0 : i32, i32
  }
  func.func @transform_5(%arg0: i32) -> (i32, i32) {
    %c0_i32 = arith.constant 0 : i32
    %c0_i32_0 = arith.constant 0 : i32
    %c0_i32_1 = arith.constant 0 : i32
    return %c0_i32, %c0_i32_0 : i32, i32
  }
  func.func @transform_6(%arg0: i32) -> (i32, i32) {
    %c0_i32 = arith.constant 0 : i32
    %c0_i32_0 = arith.constant 0 : i32
    %c0_i32_1 = arith.constant 0 : i32
    return %c0_i32, %c0_i32_0 : i32, i32
  }
  func.func @transform_7(%arg0: i32) -> (i32, i32) {
    %c0_i32 = arith.constant 0 : i32
    %c0_i32_0 = arith.constant 0 : i32
    %c0_i32_1 = arith.constant 0 : i32
    return %c0_i32, %c0_i32_0 : i32, i32
  }
  func.func @transform_8(%arg0: i32) -> (i32, i32) {
    %c0_i32 = arith.constant 0 : i32
    %c0_i32_0 = arith.constant 0 : i32
    %c0_i32_1 = arith.constant 0 : i32
    return %c0_i32, %c0_i32_0 : i32, i32
  }
  func.func @transform_9(%arg0: i32) -> (i32, i32) {
    %c0_i32 = arith.constant 0 : i32
    %c0_i32_0 = arith.constant 0 : i32
    %c0_i32_1 = arith.constant 0 : i32
    return %c0_i32, %c0_i32_0 : i32, i32
  }
}

</mosaic_0001>

<llo_original>
// kernel: _lambda_.1
$region0: #{_lambda_.1}
  #allocation0 [shape = 'u32[]', space=smem, size = 0x4, offset = 0x4, fixed_abs, tag = 'smem constant byte address 0x4 - core index']
  #allocation1 [shape = 'u32[144,128]{1,0:T(1,128)}', space=vmem, size = 0x12000, scoped, tag = 'internal scratch']
  #allocation2 [shape = 'bf16[24,32]{1,0:T(8,128)(2,1)}', space=vmem, size = 0x1800, scoped, tag = 'scratch operand']
  %s0 = inlined_call_operand.vmem [shape: bf16[20,32], index: 0, kind: input, shape index: {}]
  %s1 = inlined_call_operand.vmem [shape: bf16[20,16], index: 1, kind: input, shape index: {}]
  %s2 = inlined_call_operand.vmem [shape: bf16[20,24], index: 2, kind: input, shape index: {}]
  %s3 = inlined_call_operand.vmem [shape: f32[20,1], index: 3, kind: input, shape index: {}]
  %s4 = inlined_call_operand.vmem [shape: bf16[32,8], index: 4, kind: input, shape index: {}]
  %s5 = inlined_call_operand.vmem [shape: bf16[16,8], index: 5, kind: input, shape index: {}]
  %s6 = inlined_call_operand.vmem [shape: bf16[96,8], index: 6, kind: input, shape index: {}]
  %s7 = inlined_call_operand.vmem [shape: f32[1,8], index: 7, kind: input, shape index: {}]
  %s8 = inlined_call_operand.vmem [shape: f32[1,8], index: 8, kind: input, shape index: {}]
  %s9 = inlined_call_operand.vmem [shape: f32[20,16], index: 9, kind: output, shape index: {}]
  %s10 = sld [smem:[#allocation0]]
  $region46: #{_lambda_.1} parent=0
    _
  %s12 = ssub.s32 1, %s10
  %s13 = scalar_select 0, %s12, %s10
  // Predicated region
  $region2: #{_lambda_.1} parent=0 // pred_check
    _
  $region3: #{_lambda_.1} parent=0 // pred_check_branch
    %15 = sbr.rel (0) target = $region5
  $region4: #{_lambda_.1} parent=0 // pred_region
    _
  $region5: #{_lambda_.1} parent=0 // pred_fallthru
    _
  // Predicated region
  $region6: #{_lambda_.1} parent=0 // pred_check
    _
  $region7: #{_lambda_.1} parent=0 // pred_check_branch
    %17 = sbr.rel (0) target = $region9
  $region8: #{_lambda_.1} parent=0 // pred_region
    _
  $region9: #{_lambda_.1} parent=0 // pred_fallthru
    _
  // Predicated region
  $region10: #{_lambda_.1} parent=0 // pred_check
    _
  $region11: #{_lambda_.1} parent=0 // pred_check_branch
    %19 = sbr.rel (0) target = $region13
  $region12: #{_lambda_.1} parent=0 // pred_region
    _
  $region13: #{_lambda_.1} parent=0 // pred_fallthru
    _
  // Predicated region
  $region14: #{_lambda_.1} parent=0 // pred_check
    _
  $region15: #{_lambda_.1} parent=0 // pred_check_branch
    %21 = sbr.rel (0) target = $region17
  $region16: #{_lambda_.1} parent=0 // pred_region
    _
  $region17: #{_lambda_.1} parent=0 // pred_fallthru
    _
  // Predicated region
  $region18: #{_lambda_.1} parent=0 // pred_check
    _
  $region19: #{_lambda_.1} parent=0 // pred_check_branch
    %23 = sbr.rel (0) target = $region21
  $region20: #{_lambda_.1} parent=0 // pred_region
    _
  $region21: #{_lambda_.1} parent=0 // pred_fallthru
    _
  // Predicated region
  $region22: #{_lambda_.1} parent=0 // pred_check
    _
  $region23: #{_lambda_.1} parent=0 // pred_check_branch
    %25 = sbr.rel (0) target = $region25
  $region24: #{_lambda_.1} parent=0 // pred_region
    _
  $region25: #{_lambda_.1} parent=0 // pred_fallthru
    _
  // Predicated region
  $region26: #{_lambda_.1} parent=0 // pred_check
    _
  $region27: #{_lambda_.1} parent=0 // pred_check_branch
    %27 = sbr.rel (0) target = $region29
  $region28: #{_lambda_.1} parent=0 // pred_region
    _
  $region29: #{_lambda_.1} parent=0 // pred_fallthru
    _
  // Predicated region
  $region30: #{_lambda_.1} parent=0 // pred_check
    _
  $region31: #{_lambda_.1} parent=0 // pred_check_branch
    %29 = sbr.rel (0) target = $region33
  $region32: #{_lambda_.1} parent=0 // pred_region
    _
  $region33: #{_lambda_.1} parent=0 // pred_fallthru
    _
  // Predicated region
  $region34: #{_lambda_.1} parent=0 // pred_check
    _
  $region35: #{_lambda_.1} parent=0 // pred_check_branch
    %31 = sbr.rel (0) target = $region37
  $region36: #{_lambda_.1} parent=0 // pred_region
    _
  $region37: #{_lambda_.1} parent=0 // pred_fallthru
    _
  %v33 = vld [vmem:[%s0] sm:$0xf]
  %v34 = vld [vmem:[%s0 + $0x4] sm:$0xf]
  %v35 = vld [vmem:[%s0 + $0x8] sm:$0x3]
  %v36 = vld [vmem:[%s4] sm:$0xf]
  %v37 = vld [vmem:[%s4 + $0x4] sm:$0xf]
  %v38 = vld [vmem:[%s4 + $0x8] sm:$0xf]
  %v39 = vld [vmem:[%s4 + $0xc] sm:$0xf]
  %v40 = vld [vmem:[%s1] sm:$0xf]
  %v41 = vld [vmem:[%s1 + $0x4] sm:$0xf]
  %v42 = vld [vmem:[%s1 + $0x8] sm:$0x3]
  %v43 = vld [vmem:[%s5] sm:$0xf]
  %v44 = vld [vmem:[%s5 + $0x4] sm:$0xf]
  %v48 = vunpack.c.l.b16 %v40
  %v49 = vunpack.c.l.b16 %v41
  %v50 = vunpack.c.l.b16 %v42
  %v51 = vpack.c.b16 %v49, %v48
  %v52 = vpack.c.b16 %v50, %v50
  %v55 = vunpack.c.l.b16 %v43
  %v56 = vunpack.c.l.b16 %v44
  %v57 = vpack.c.b16 %v56, %v55
  %vm59 = vcmask 130048
  %v61 = vsel %vm59, %v51, 0
  %v64 = vsel %vm59, %v52, 0
  %66 = vmatprep.subr.bf16.mxu0 0
  %67 = vmatpush1.bf16.msra.mxu0 %v57
  %68 = vmatprep.subr.bf16.mxu0 0
  %69 = vmatpush1.bf16.msra.mxu0 0
  %70 = vmatprep.subr.bf16.mxu0 0
  %71 = vmatpush1.bf16.msra.mxu0 0
  %72 = vmatprep.subr.bf16.mxu0 0
  %73 = vmatpush1.bf16.msra.mxu0 0
  %74 = vmatprep.subr.bf16.mxu0 0
  %75 = vmatpush1.bf16.msra.mxu0 0
  %76 = vmatprep.subr.bf16.mxu0 0
  %77 = vmatpush1.bf16.msra.mxu0 0
  %78 = vmatprep.subr.bf16.mxu0 0
  %79 = vmatpush1.bf16.msra.mxu0 0
  %80 = vmatprep.subr.bf16.mxu0 0
  %81 = vmatpush1.bf16.msra.mxu0 0
  %82 = vmatprep.subr.bf16.mxu0 0
  %83 = vmatpush1.bf16.msra.mxu0 0
  %84 = vmatprep.subr.bf16.mxu0 0
  %85 = vmatpush1.bf16.msra.mxu0 0
  %86 = vmatprep.subr.bf16.mxu0 0
  %87 = vmatpush1.bf16.msra.mxu0 0
  %88 = vmatprep.subr.bf16.mxu0 0
  %89 = vmatpush1.bf16.msra.mxu0 0
  %90 = vmatprep.subr.bf16.mxu0 0
  %91 = vmatpush1.bf16.msra.mxu0 0
  %92 = vmatprep.subr.bf16.mxu0 0
  %93 = vmatpush1.bf16.msra.mxu0 0
  %94 = vmatprep.subr.bf16.mxu0 0
  %95 = vmatpush1.bf16.msra.mxu0 0
  %96 = vmatprep.subr.bf16.mxu0 0
  %97 = vmatpush1.bf16.msra.mxu0 0
  %98 = vmatprep.mubr.bf16.mxu0 0
  %99 = vmatmul.mubr.bf16.gmra.mrb[0].mxu0 %v61
  %v100 = vpop.f32.mrb[0].mxu0
  %v101 = vadd.f32 0.0, %v100
  %v102 = vpop.f32.mrb[0].mxu0
  %v103 = vpop.f32.mrb[0].mxu0
  %v104 = vadd.f32 0.0, %v103
  %v105 = vpop.f32.mrb[0].mxu0
  %106 = vmatprep.mubr.bf16.mxu0 0
  %107 = vmatmul.mubr.bf16.gmra.mrb[0].mxu0 %v64
  %v108 = vpop.f32.mrb[0].mxu0
  %v109 = vadd.f32 0.0, %v108
  %v110 = vpop.f32.mrb[0].mxu0
  %v111 = vpop.f32.mrb[0].mxu0
  %v112 = vpop.f32.mrb[0].mxu0
  %113 = vdwg.mxu0
  %v117 = vunpack.c.l.b16 %v33
  %v118 = vunpack.c.l.b16 %v34
  %v119 = vunpack.c.l.b16 %v35
  %v120 = vpack.c.b16 %v118, %v117
  %v121 = vpack.c.b16 %v119, %v119
  %v126 = vunpack.c.l.b16 %v36
  %v127 = vunpack.c.l.b16 %v37
  %v128 = vunpack.c.l.b16 %v38
  %v129 = vunpack.c.l.b16 %v39
  %v130 = vpack.c.b16 %v127, %v126
  %v131 = vpack.c.b16 %v129, %v128
  %vm134 = vcmask 261120
  %v136 = vsel %vm134, %v120, 0
  %v139 = vsel %vm134, %v121, 0
  %141 = vmatprep.subr.bf16.mxu0 0
  %142 = vmatpush1.bf16.msra.mxu0 %v130
  %143 = vmatprep.subr.bf16.mxu0 0
  %144 = vmatpush1.bf16.msra.mxu0 %v131
  %145 = vmatprep.subr.bf16.mxu0 0
  %146 = vmatpush1.bf16.msra.mxu0 0
  %147 = vmatprep.subr.bf16.mxu0 0
  %148 = vmatpush1.bf16.msra.mxu0 0
  %149 = vmatprep.subr.bf16.mxu0 0
  %150 = vmatpush1.bf16.msra.mxu0 0
  %151 = vmatprep.subr.bf16.mxu0 0
  %152 = vmatpush1.bf16.msra.mxu0 0
  %153 = vmatprep.subr.bf16.mxu0 0
  %154 = vmatpush1.bf16.msra.mxu0 0
  %155 = vmatprep.subr.bf16.mxu0 0
  %156 = vmatpush1.bf16.msra.mxu0 0
  %157 = vmatprep.subr.bf16.mxu0 0
  %158 = vmatpush1.bf16.msra.mxu0 0
  %159 = vmatprep.subr.bf16.mxu0 0
  %160 = vmatpush1.bf16.msra.mxu0 0
  %161 = vmatprep.subr.bf16.mxu0 0
  %162 = vmatpush1.bf16.msra.mxu0 0
  %163 = vmatprep.subr.bf16.mxu0 0
  %164 = vmatpush1.bf16.msra.mxu0 0
  %165 = vmatprep.subr.bf16.mxu0 0
  %166 = vmatpush1.bf16.msra.mxu0 0
  %167 = vmatprep.subr.bf16.mxu0 0
  %168 = vmatpush1.bf16.msra.mxu0 0
  %169 = vmatprep.subr.bf16.mxu0 0
  %170 = vmatpush1.bf16.msra.mxu0 0
  %171 = vmatprep.subr.bf16.mxu0 0
  %172 = vmatpush1.bf16.msra.mxu0 0
  %173 = vmatprep.mubr.bf16.mxu0 0
  %174 = vmatmul.mubr.bf16.gmra.mrb[0].mxu0 %v136
  %v175 = vpop.f32.mrb[0].mxu0
  %v176 = vadd.f32 %v101, %v175
  %v177 = vpop.f32.mrb[0].mxu0
  %v178 = vpop.f32.mrb[0].mxu0
  %v179 = vadd.f32 %v104, %v178
  %v180 = vpop.f32.mrb[0].mxu0
  %181 = vmatprep.mubr.bf16.mxu0 0
  %182 = vmatmul.mubr.bf16.gmra.mrb[0].mxu0 %v139
  %v183 = vpop.f32.mrb[0].mxu0
  %v184 = vadd.f32 %v109, %v183
  %v185 = vpop.f32.mrb[0].mxu0
  %v186 = vpop.f32.mrb[0].mxu0
  %v187 = vpop.f32.mrb[0].mxu0
  %188 = vdwg.mxu0
  %v189 = vld [vmem:[%s7] sm:$0x1]
  %v191 = vlaneseq
  %v192 = vshrl.u32 %v191, 7
  %v193 = vsub.s32 0, %v192
  %v194 = vrot.slane %v189, %v193
  %v196 = vadd.f32 %v176, %v194
  %v197 = vadd.f32 %v179, %v194
  %v198 = vadd.f32 %v184, %v194
  %vm199 = vcmp.gt.f32.partialorder %v196, 0.0
  %vm200 = vcmp.gt.f32.partialorder %v197, 0.0
  %vm201 = vcmp.gt.f32.partialorder %v198, 0.0
  %v202 = vmin.f32 %v196, 0.0
  %v203 = vmin.f32 %v197, 0.0
  %v204 = vmin.f32 %v198, 0.0
  %v205 = vmul.f32 %v202, 1.442695
  %v206 = vpow.pop %v205
  %v207 = vmul.f32 %v203, 1.442695
  %v208 = vpow.pop %v207
  %v209 = vmul.f32 %v204, 1.442695
  %v210 = vpow.pop %v209
  %v211 = vsub.f32 %v206, 1.0
  %v212 = vsub.f32 %v208, 1.0
  %v213 = vsub.f32 %v210, 1.0
  %v214 = vsel %vm199, %v196, %v211
  %v215 = vsel %vm200, %v197, %v212
  %v216 = vsel %vm201, %v198, %v213
  %v217 = vld [vmem:[%s3] sm:$0xff]
  %v218 = vld [vmem:[%s3 + $0x8] sm:$0xff]
  %v219 = vld [vmem:[%s3 + $0x10] sm:$0xf]
  %221 = vset.pattern.permute.xlu0 0
  %222 = vperm.xlu0 %221, %v217
  %v223 = vpop.permute.xlu0 %222
  %226 = vset.pattern.permute.xlu0 0
  %227 = vperm.xlu0 %226, %v218
  %v228 = vpop.permute.xlu0 %227
  %231 = vset.pattern.permute.xlu0 0
  %232 = vperm.xlu0 %231, %v219
  %v233 = vpop.permute.xlu0 %232
  %v235 = vmul.f32 %v214, %v223
  %v236 = vmul.f32 %v215, %v228
  %v237 = vmul.f32 %v216, %v233
  %v238 = vld [vmem:[%s2] sm:$0xf]
  %v239 = vld [vmem:[%s2 + $0x4] sm:$0xf]
  %v240 = vld [vmem:[%s2 + $0x8] sm:$0x3]
  %vm241 = vcmask 191488
  %242 = vst.msk [vmem:[#allocation2] sm:$0xf] %vm241, %v238
  %243 = vst.msk [vmem:[#allocation2 + $0x4] sm:$0xf] %vm241, %v239
  %vm244 = vcmask 189440
  %245 = vst.msk [vmem:[#allocation2 + $0x8] sm:$0x3] %vm244, %v240
  %vm246 = vcmask 254144
  %vm247 = vsmask.f32 256
  %vm248 = vmand %vm246, %vm247
  %v249 = vld [vmem:[#allocation2] sm:$0x1]
  %v250 = vsel %vm248, 0, %v249
  %251 = vst [vmem:[#allocation2] sm:$0x1] %v250
  %v252 = vpack.c.bf16 %v236, %v235
  %v253 = vpack.c.bf16 %v237, %v237
  %v256 = vunpack.c.l.b16 %v252
  %v257 = vunpack.c.h.b16 %v252
  %v258 = vunpack.c.l.b16 %v253
  %v259 = vpack.c.b16 %v256, %v256
  %v260 = vpack.c.b16 %v257, %v257
  %v261 = vpack.c.b16 %v258, %v258
  %vm262 = vsmask.f32 4368
  %vm263 = vmor %vm247, %vm262
  %v265 = vshrl.u32 %v259, 16
  %v267 = vrot.slane %v265, 7
  %v268 = vshll.u32 %v259, 16
  %v270 = vor.u32 %v267, %v268
  %v271 = vrot.slane %v267, 4
  %v273 = vshrl.u32 %v260, 16
  %v275 = vrot.slane %v273, 7
  %v276 = vshll.u32 %v260, 16
  %v278 = vor.u32 %v275, %v276
  %v279 = vsel %vm263, %v271, %v278
  %v280 = vrot.slane %v275, 4
  %v282 = vshrl.u32 %v261, 16
  %v284 = vrot.slane %v282, 7
  %v285 = vshll.u32 %v261, 16
  %v287 = vor.u32 %v284, %v285
  %v288 = vsel %vm263, %v280, %v287
  %289 = vrot.lane.b32.xlu0 %v270, 24
  %v290 = vpop.permute.xlu0 %289
  %291 = vrot.lane.b32.xlu0 %v279, 24
  %v292 = vpop.permute.xlu0 %291
  %293 = vrot.lane.b32.xlu0 %v288, 24
  %v294 = vpop.permute.xlu0 %293
  %vm298 = vcmask 257216
  %vm299 = vsmask.f32 7938
  %vm300 = vmand %vm298, %vm299
  %v301 = vld [vmem:[#allocation2] sm:$0xf]
  %v302 = vsel %vm300, %v290, %v301
  %303 = vst [vmem:[#allocation2] sm:$0xf] %v302
  %vm304 = vcmask 257216
  %305 = vst.msk [vmem:[#allocation2 + $0x4] sm:$0xf] %vm304, %v292
  %vm306 = vcmask 255168
  %307 = vst.msk [vmem:[#allocation2 + $0x8] sm:$0x3] %vm306, %v294
  %v308 = vld [vmem:[#allocation2] sm:$0xf]
  %v309 = vld [vmem:[#allocation2 + $0x4] sm:$0xf]
  %v310 = vld [vmem:[#allocation2 + $0x8] sm:$0x1]
  %v311 = vld [vmem:[%s6] sm:$0xf]
  %v312 = vld [vmem:[%s6 + $0x4] sm:$0xf]
  %v313 = vld [vmem:[%s6 + $0x8] sm:$0xf]
  %v314 = vld [vmem:[%s6 + $0xc] sm:$0xf]
  %v315 = vld [vmem:[#allocation2 + $0x8] sm:$0x3]
  %v316 = vld [vmem:[%s6 + $0x10] sm:$0xf]
  %v317 = vld [vmem:[%s6 + $0x14] sm:$0xf]
  %v318 = vld [vmem:[%s6 + $0x18] sm:$0xf]
  %v319 = vld [vmem:[%s6 + $0x1c] sm:$0xf]
  %v323 = vunpack.c.l.b16 %v308
  %v324 = vunpack.c.l.b16 %v309
  %v325 = vunpack.c.l.b16 %v315
  %v326 = vpack.c.b16 %v324, %v323
  %v327 = vpack.c.b16 %v325, %v325
  %vm328 = vsmask.f32 7424
  %v330 = vshrl.u32 %v326, 16
  %v332 = vshll.u32 %v326, 16
  %v334 = vrot.slane %v332, 1
  %v335 = vor.u32 %v330, %v334
  %v337 = vshll.u32 %v327, 16
  %v339 = vrot.slane %v337, 1
  %v340 = vsel %vm328, %v335, %v339
  %v341 = vshrl.u32 %v327, 16
  %v343 = vor.u32 %v341, %v339
  %v348 = vunpack.c.l.b16 %v316
  %v349 = vunpack.c.l.b16 %v317
  %v350 = vunpack.c.l.b16 %v318
  %v351 = vunpack.c.l.b16 %v319
  %v352 = vpack.c.b16 %v349, %v348
  %v353 = vpack.c.b16 %v351, %v350
  %v357 = vsel %vm134, %v340, 0
  %v360 = vsel %vm134, %v343, 0
  %362 = vmatprep.subr.bf16.mxu0 0
  %363 = vmatpush1.bf16.msra.mxu0 %v352
  %364 = vmatprep.subr.bf16.mxu0 0
  %365 = vmatpush1.bf16.msra.mxu0 %v353
  %366 = vmatprep.subr.bf16.mxu0 0
  %367 = vmatpush1.bf16.msra.mxu0 0
  %368 = vmatprep.subr.bf16.mxu0 0
  %369 = vmatpush1.bf16.msra.mxu0 0
  %370 = vmatprep.subr.bf16.mxu0 0
  %371 = vmatpush1.bf16.msra.mxu0 0
  %372 = vmatprep.subr.bf16.mxu0 0
  %373 = vmatpush1.bf16.msra.mxu0 0
  %374 = vmatprep.subr.bf16.mxu0 0
  %375 = vmatpush1.bf16.msra.mxu0 0
  %376 = vmatprep.subr.bf16.mxu0 0
  %377 = vmatpush1.bf16.msra.mxu0 0
  %378 = vmatprep.subr.bf16.mxu0 0
  %379 = vmatpush1.bf16.msra.mxu0 0
  %380 = vmatprep.subr.bf16.mxu0 0
  %381 = vmatpush1.bf16.msra.mxu0 0
  %382 = vmatprep.subr.bf16.mxu0 0
  %383 = vmatpush1.bf16.msra.mxu0 0
  %384 = vmatprep.subr.bf16.mxu0 0
  %385 = vmatpush1.bf16.msra.mxu0 0
  %386 = vmatprep.subr.bf16.mxu0 0
  %387 = vmatpush1.bf16.msra.mxu0 0
  %388 = vmatprep.subr.bf16.mxu0 0
  %389 = vmatpush1.bf16.msra.mxu0 0
  %390 = vmatprep.subr.bf16.mxu0 0
  %391 = vmatpush1.bf16.msra.mxu0 0
  %392 = vmatprep.subr.bf16.mxu0 0
  %393 = vmatpush1.bf16.msra.mxu0 0
  %394 = vmatprep.mubr.bf16.mxu0 0
  %395 = vmatmul.mubr.bf16.gmra.mrb[0].mxu0 %v357
  %v396 = vpop.f32.mrb[0].mxu0
  %v397 = vadd.f32 0.0, %v396
  %v398 = vpop.f32.mrb[0].mxu0
  %v399 = vpop.f32.mrb[0].mxu0
  %v400 = vadd.f32 0.0, %v399
  %v401 = vpop.f32.mrb[0].mxu0
  %402 = vmatprep.mubr.bf16.mxu0 0
  %403 = vmatmul.mubr.bf16.gmra.mrb[0].mxu0 %v360
  %v404 = vpop.f32.mrb[0].mxu0
  %v405 = vadd.f32 0.0, %v404
  %v406 = vpop.f32.mrb[0].mxu0
  %v407 = vpop.f32.mrb[0].mxu0
  %v408 = vpop.f32.mrb[0].mxu0
  %409 = vdwg.mxu0
  %v411 = vunpack.c.l.b16 %v310
  %v412 = vpack.c.b16 %v411, %v411
  %v417 = vunpack.c.l.b16 %v311
  %v418 = vunpack.c.l.b16 %v312
  %v419 = vunpack.c.l.b16 %v313
  %v420 = vunpack.c.l.b16 %v314
  %v421 = vpack.c.b16 %v418, %v417
  %v422 = vpack.c.b16 %v420, %v419
  %v425 = vsel %vm134, %v326, 0
  %v428 = vsel %vm134, %v412, 0
  %430 = vmatprep.subr.bf16.mxu0 0
  %431 = vmatpush1.bf16.msra.mxu0 %v421
  %432 = vmatprep.subr.bf16.mxu0 0
  %433 = vmatpush1.bf16.msra.mxu0 %v422
  %434 = vmatprep.subr.bf16.mxu0 0
  %435 = vmatpush1.bf16.msra.mxu0 0
  %436 = vmatprep.subr.bf16.mxu0 0
  %437 = vmatpush1.bf16.msra.mxu0 0
  %438 = vmatprep.subr.bf16.mxu0 0
  %439 = vmatpush1.bf16.msra.mxu0 0
  %440 = vmatprep.subr.bf16.mxu0 0
  %441 = vmatpush1.bf16.msra.mxu0 0
  %442 = vmatprep.subr.bf16.mxu0 0
  %443 = vmatpush1.bf16.msra.mxu0 0
  %444 = vmatprep.subr.bf16.mxu0 0
  %445 = vmatpush1.bf16.msra.mxu0 0
  %446 = vmatprep.subr.bf16.mxu0 0
  %447 = vmatpush1.bf16.msra.mxu0 0
  %448 = vmatprep.subr.bf16.mxu0 0
  %449 = vmatpush1.bf16.msra.mxu0 0
  %450 = vmatprep.subr.bf16.mxu0 0
  %451 = vmatpush1.bf16.msra.mxu0 0
  %452 = vmatprep.subr.bf16.mxu0 0
  %453 = vmatpush1.bf16.msra.mxu0 0
  %454 = vmatprep.subr.bf16.mxu0 0
  %455 = vmatpush1.bf16.msra.mxu0 0
  %456 = vmatprep.subr.bf16.mxu0 0
  %457 = vmatpush1.bf16.msra.mxu0 0
  %458 = vmatprep.subr.bf16.mxu0 0
  %459 = vmatpush1.bf16.msra.mxu0 0
  %460 = vmatprep.subr.bf16.mxu0 0
  %461 = vmatpush1.bf16.msra.mxu0 0
  %462 = vmatprep.mubr.bf16.mxu0 0
  %463 = vmatmul.mubr.bf16.gmra.mrb[0].mxu0 %v425
  %v464 = vpop.f32.mrb[0].mxu0
  %v465 = vadd.f32 %v397, %v464
  %v466 = vpop.f32.mrb[0].mxu0
  %v467 = vpop.f32.mrb[0].mxu0
  %v468 = vadd.f32 %v400, %v467
  %v469 = vpop.f32.mrb[0].mxu0
  %470 = vmatprep.mubr.bf16.mxu0 0
  %471 = vmatmul.mubr.bf16.gmra.mrb[0].mxu0 %v428
  %v472 = vpop.f32.mrb[0].mxu0
  %v473 = vadd.f32 %v405, %v472
  %v474 = vpop.f32.mrb[0].mxu0
  %v475 = vpop.f32.mrb[0].mxu0
  %v476 = vpop.f32.mrb[0].mxu0
  %477 = vdwg.mxu0
  %v478 = vld [vmem:[#allocation2] sm:$0xe]
  %v479 = vld [vmem:[%s6 + $0x20] sm:$0xf]
  %v480 = vld [vmem:[%s6 + $0x24] sm:$0xf]
  %v481 = vld [vmem:[%s6 + $0x28] sm:$0xf]
  %v482 = vld [vmem:[%s6 + $0x2c] sm:$0xf]
  %v484 = vunpack.c.l.b16 %v478
  %v485 = vpack.c.b16 %v324, %v484
  %vm486 = vcmask 1046528
  %v487 = vrot.slane %v485, 1
  %v488 = vrot.slane %v327, 1
  %v489 = vsel %vm486, %v487, %v488
  %v494 = vunpack.c.l.b16 %v479
  %v495 = vunpack.c.l.b16 %v480
  %v496 = vunpack.c.l.b16 %v481
  %v497 = vunpack.c.l.b16 %v482
  %v498 = vpack.c.b16 %v495, %v494
  %v499 = vpack.c.b16 %v497, %v496
  %v503 = vsel %vm134, %v489, 0
  %v506 = vsel %vm134, %v488, 0
  %508 = vmatprep.subr.bf16.mxu0 0
  %509 = vmatpush1.bf16.msra.mxu0 %v498
  %510 = vmatprep.subr.bf16.mxu0 0
  %511 = vmatpush1.bf16.msra.mxu0 %v499
  %512 = vmatprep.subr.bf16.mxu0 0
  %513 = vmatpush1.bf16.msra.mxu0 0
  %514 = vmatprep.subr.bf16.mxu0 0
  %515 = vmatpush1.bf16.msra.mxu0 0
  %516 = vmatprep.subr.bf16.mxu0 0
  %517 = vmatpush1.bf16.msra.mxu0 0
  %518 = vmatprep.subr.bf16.mxu0 0
  %519 = vmatpush1.bf16.msra.mxu0 0
  %520 = vmatprep.subr.bf16.mxu0 0
  %521 = vmatpush1.bf16.msra.mxu0 0
  %522 = vmatprep.subr.bf16.mxu0 0
  %523 = vmatpush1.bf16.msra.mxu0 0
  %524 = vmatprep.subr.bf16.mxu0 0
  %525 = vmatpush1.bf16.msra.mxu0 0
  %526 = vmatprep.subr.bf16.mxu0 0
  %527 = vmatpush1.bf16.msra.mxu0 0
  %528 = vmatprep.subr.bf16.mxu0 0
  %529 = vmatpush1.bf16.msra.mxu0 0
  %530 = vmatprep.subr.bf16.mxu0 0
  %531 = vmatpush1.bf16.msra.mxu0 0
  %532 = vmatprep.subr.bf16.mxu0 0
  %533 = vmatpush1.bf16.msra.mxu0 0
  %534 = vmatprep.subr.bf16.mxu0 0
  %535 = vmatpush1.bf16.msra.mxu0 0
  %536 = vmatprep.subr.bf16.mxu0 0
  %537 = vmatpush1.bf16.msra.mxu0 0
  %538 = vmatprep.subr.bf16.mxu0 0
  %539 = vmatpush1.bf16.msra.mxu0 0
  %540 = vmatprep.mubr.bf16.mxu0 0
  %541 = vmatmul.mubr.bf16.gmra.mrb[0].mxu0 %v503
  %v542 = vpop.f32.mrb[0].mxu0
  %v543 = vadd.f32 0.0, %v542
  %v544 = vpop.f32.mrb[0].mxu0
  %v545 = vpop.f32.mrb[0].mxu0
  %v546 = vadd.f32 0.0, %v545
  %v547 = vpop.f32.mrb[0].mxu0
  %548 = vmatprep.mubr.bf16.mxu0 0
  %549 = vmatmul.mubr.bf16.gmra.mrb[0].mxu0 %v506
  %v550 = vpop.f32.mrb[0].mxu0
  %v551 = vadd.f32 0.0, %v550
  %v552 = vpop.f32.mrb[0].mxu0
  %v553 = vpop.f32.mrb[0].mxu0
  %v554 = vpop.f32.mrb[0].mxu0
  %555 = vdwg.mxu0
  %v556 = vadd.f32 %v465, %v543
  %v557 = vadd.f32 %v468, %v546
  %v558 = vadd.f32 %v473, %v551
  %v559 = vld [vmem:[%s8] sm:$0x1]
  %v561 = vlaneseq
  %v562 = vshrl.u32 %v561, 7
  %v563 = vsub.s32 0, %v562
  %v564 = vrot.slane %v559, %v563
  %v566 = vadd.f32 %v556, %v564
  %v567 = vadd.f32 %v557, %v564
  %v568 = vadd.f32 %v558, %v564
  %vm569 = vcmp.gt.f32.partialorder %v566, 0.0
  %vm570 = vcmp.gt.f32.partialorder %v567, 0.0
  %vm571 = vcmp.gt.f32.partialorder %v568, 0.0
  %v572 = vmin.f32 %v566, 0.0
  %v573 = vmin.f32 %v567, 0.0
  %v574 = vmin.f32 %v568, 0.0
  %v575 = vmul.f32 %v572, 1.442695
  %v576 = vpow.pop %v575
  %v577 = vmul.f32 %v573, 1.442695
  %v578 = vpow.pop %v577
  %v579 = vmul.f32 %v574, 1.442695
  %v580 = vpow.pop %v579
  %v581 = vsub.f32 %v576, 1.0
  %v582 = vsub.f32 %v578, 1.0
  %v583 = vsub.f32 %v580, 1.0
  %v584 = vsel %vm569, %v566, %v581
  %v585 = vsel %vm570, %v567, %v582
  %v586 = vsel %vm571, %v568, %v583
  %v587 = vadd.f32 %v584, %v214
  %v588 = vadd.f32 %v585, %v215
  %v589 = vadd.f32 %v586, %v216
  %593 = vrot.lane.b32.xlu0 %v235, 8
  %v594 = vpop.permute.xlu0 %593
  %595 = vrot.lane.b32.xlu0 %v236, 8
  %v596 = vpop.permute.xlu0 %595
  %597 = vrot.lane.b32.xlu0 %v237, 8
  %v598 = vpop.permute.xlu0 %597
  %vm602 = vcmask 64512
  %v603 = vsel %vm602, %v587, %v594
  %v604 = vsel %vm602, %v588, %v596
  %v605 = vsel %vm602, %v589, %v598
  %606 = vst.msk [vmem:[%s9] sm:$0xff] %vm59, %v603
  %607 = vst.msk [vmem:[%s9 + $0x8] sm:$0xff] %vm59, %v604
  %vm608 = vcmask 123904
  %609 = vst.msk [vmem:[%s9 + $0x10] sm:$0x3] %vm608, %v605
  %610 = vst.msk [vmem:[%s9 + $0x12] sm:$0x3] %vm608, 0.0
  // Predicated region
  $region38: #{_lambda_.1} parent=0 // pred_check
    _
  $region39: #{_lambda_.1} parent=0 // pred_check_branch
    %612 = sbr.rel (0) target = $region41
  $region40: #{_lambda_.1} parent=0 // pred_region
    _
  $region41: #{_lambda_.1} parent=0 // pred_fallthru
    _
  // Predicated region
  $region42: #{_lambda_.1} parent=0 // pred_check
    _
  $region43: #{_lambda_.1} parent=0 // pred_check_branch
    %614 = sbr.rel (0) target = $region45
  $region44: #{_lambda_.1} parent=0 // pred_region
    _
  $region45: #{_lambda_.1} parent=0 // pred_fallthru
    _

</llo_original>
